<compile_context>
chip_gen: v7x
topology: tpu7x:2x2x1
jax: 0.10.0
libtpu: 0.0.40
codegen_flags: <defaults>
</compile_context>

<pallas_src>
import math

import jax
import jax.numpy as jnp
from jax.experimental import pallas as pl
from jax.experimental.pallas import tpu as pltpu

LN_EPS = 1e-5            # nn.LayerNorm default
_MIB = 1024 * 1024


# ------------------------------------------------------------------ kernels
def _make_resident_kernel(lb, hid_f):
    """Weights fully VMEM-resident; `lb` lead rows per grid step (small, unrolled)."""
    inv_hid = 1.0 / float(hid_f)

    def kernel(x_ref, w1t_ref, b1_ref, g_ref, beta_ref, w2t_ref, b2_ref, o_ref):
        w1t = w1t_ref[...]                        # (hid, in)
        w2t = w2t_ref[...]                        # (out, hid)
        b1 = b1_ref[...].astype(jnp.float32)      # (hid, 1)
        g = g_ref[...].astype(jnp.float32)        # (hid, 1)
        beta = beta_ref[...].astype(jnp.float32)  # (hid, 1)
        b2 = b2_ref[...].astype(jnp.float32)      # (out, 1)
        for b in range(lb):                       # static unroll, lb <= 8
            x = x_ref[b]                          # (in, tl) native dtype -> MXU
            # Linear 1 (channel-major), f32 accumulation, bias, ReLU.
            h = jnp.dot(w1t, x, preferred_element_type=jnp.float32)
            h = jnp.maximum(h + b1, 0.0)
            # Fused LayerNorm over hid (axis 0): one pass for sum / sum-of-squares,
            # then a single scale+shift pass (~5 VALU ops/elem, 2 live f32 tiles).
            s1 = jnp.sum(h, axis=0, keepdims=True)
            s2 = jnp.sum(h * h, axis=0, keepdims=True)
            mean = s1 * inv_hid
            var = jnp.maximum(s2 * inv_hid - mean * mean, 0.0)
            rstd = jax.lax.rsqrt(var + LN_EPS)
            hn = (h - mean) * rstd * g + beta
            # Dropout(p=0.0) is the identity.
            # TODO(synk): stochastic dropout (p > 0) not implemented in-kernel.
            # Linear 2: feed MXU in the weights' native dtype (deliberate), f32 acc.
            y = jnp.dot(w2t, hn.astype(w2t_ref.dtype),
                        preferred_element_type=jnp.float32)
            o_ref[b] = (y + b2).astype(o_ref.dtype)

    return kernel


def _make_ktiled_kernel(hid_f):
    """in_f reduction tiled across the last grid axis with an f32 VMEM accumulator."""
    inv_hid = 1.0 / float(hid_f)

    def kernel(x_ref, w1t_ref, b1_ref, g_ref, beta_ref, w2t_ref, b2_ref, o_ref,
               acc_ref):
        k = pl.program_id(2)

        @pl.when(k == 0)
        def _():
            acc_ref[...] = jnp.zeros_like(acc_ref)

        acc_ref[...] += jnp.dot(w1t_ref[...], x_ref[0],
                                preferred_element_type=jnp.float32)

        @pl.when(k == pl.num_programs(2) - 1)
        def _():
            h = jnp.maximum(acc_ref[...] + b1_ref[...].astype(jnp.float32), 0.0)
            s1 = jnp.sum(h, axis=0, keepdims=True)
            s2 = jnp.sum(h * h, axis=0, keepdims=True)
            mean = s1 * inv_hid
            rstd = jax.lax.rsqrt(
                jnp.maximum(s2 * inv_hid - mean * mean, 0.0) + LN_EPS)
            hn = ((h - mean) * rstd * g_ref[...].astype(jnp.float32)
                  + beta_ref[...].astype(jnp.float32))
            y = jnp.dot(w2t_ref[...], hn.astype(w2t_ref.dtype),
                        preferred_element_type=jnp.float32)
            o_ref[0] = (y + b2_ref[...].astype(jnp.float32)).astype(o_ref.dtype)
        # TODO(synk): also tile hid/out (W2) via two-pass LN stats for layers where a
        # single weight panel exceeds VMEM.

    return kernel


# ------------------------------------------------------- capability / planning
_BUFFERED1_OK = None


def _single_buffer_consts_supported():
    """Compile-time probe (lower + compile only, never executed) for pl.Buffered(1)."""
    global _BUFFERED1_OK
    if _BUFFERED1_OK is None:
        try:
            def probe_kernel(c_ref, o_ref):
                o_ref[...] = c_ref[...] * 2.0

            probe = pl.pallas_call(
                probe_kernel,
                out_shape=jax.ShapeDtypeStruct((8, 128), jnp.float32),
                grid_spec=pltpu.PrefetchScalarGridSpec(
                    num_scalar_prefetch=0,
                    grid=(2,),
                    in_specs=[pl.BlockSpec((8, 128), lambda i: (0, 0),
                                           pipeline_mode=pl.Buffered(1))],
                    out_specs=pl.BlockSpec((8, 128), lambda i: (0, 0)),
                ),
            )
            jax.jit(probe).lower(
                jax.ShapeDtypeStruct((8, 128), jnp.float32)).compile()
            _BUFFERED1_OK = True
        except Exception:
            _BUFFERED1_OK = False
    return _BUFFERED1_OK


def _vmem_capacity_bytes():
    try:
        return int(pltpu.get_tpu_info().vmem_capacity_bytes)
    except Exception:
        return 64 * _MIB   # conservative (v7x per-TC VMEM)


def _choose_plan(lead, in_f, hid_f, out_f, tail,
                 x_itemsize, w1_itemsize, w2_itemsize, const_bufs):
    cap = _vmem_capacity_bytes()
    # Tighter tile-selection budget on small-VMEM generations (v7x: 64 MiB / TC).
    budget = int(cap * (0.40 if cap <= 80 * _MIB else 0.50))

    w1_bytes = hid_f * in_f * w1_itemsize
    w2_bytes = out_f * hid_f * w2_itemsize
    vec_bytes = 3 * hid_f * w1_itemsize + out_f * w2_itemsize

    def round_tl(tl):
        tl = min(int(tl), 4096)
        tl = (tl // 128) * 128
        if tl >= 512:
            tl = (tl // 256) * 256     # full 256x256 MXU tiles on v6e/v7x
        return tl

    # ---- plan A: fully-resident weights (preferred on v5e/v6e 128 MiB VMEM) ----
    resident_bytes = const_bufs * (w1_bytes + w2_bytes + vec_bytes)
    # Per output-lane column: double-buffered x/out blocks + ~3 live f32 (hid,) temps
    # after the LayerNorm fusion.
    per_col_res = 2 * x_itemsize * (in_f + out_f) + 3 * 4 * hid_f
    min_cols = min(tail, 128)
    if resident_bytes + per_col_res * min_cols <= budget:
        avail = budget - resident_bytes
        tl = round_tl(max(128, avail // per_col_res))
        lb = 1
        if tail <= tl:
            if lead == 1 and tail >= 256:
                # lead==1 would give a 1-step grid: split the tail so both v7x
                # TensorCores get a block (harmless on 1-TC v5e/v6e).
                tl = ((tail + 255) // 256) * 128
            else:
                tl = tail
                if lead > 1 and tail < 512:
                    # Fold lead rows per grid step (fewer ~0.35us steps, larger HBM
                    # DMAs for short tails) while keeping >=2 grid steps for v7x.
                    desired = min(lead // 2, -(-512 // tail), 8,
                                  max(1, avail // max(1, per_col_res * tail)))
                    for cand in range(max(1, desired), 0, -1):
                        if lead % cand == 0:
                            lb = cand
                            break
        return {"mode": "resident", "tl": tl, "lb": lb, "tk": in_f}

    # ---- plan B: K-tiled over in_f (needed on v7x 64 MiB at production sizes) ----
    if in_f % 128 == 0:
        tk_candidates = [t for t in range(128, in_f + 1, 128) if in_f % t == 0]
        for tk in reversed(tk_candidates):   # largest tile that fits the budget
            resident_kt = (const_bufs * (w2_bytes + vec_bytes)
                           + 2 * hid_f * tk * w1_itemsize)   # w1 panel is pipelined
            per_col_kt = 2 * x_itemsize * (tk + out_f) + 12 * hid_f
            if resident_kt + per_col_kt * min_cols <= budget:
                tl = round_tl(max(128, (budget - resident_kt) // per_col_kt))
                if tail <= tl:
                    tl = tail
                return {"mode": "ktiled", "tl": tl, "lb": 1, "tk": tk}

    # TODO(synk): tile hid/out (W2) as well when even one weight panel exceeds VMEM;
    # fall back to minimal resident tiling for now.
    return {"mode": "resident", "tl": min(tail, 128), "lb": 1, "tk": in_f}


# --------------------------------------------------------------- pallas_call glue
def _const_specs(shapes, ngrid, single_buffer):
    specs = []
    for shape in shapes:
        nd = len(shape)
        if ngrid == 2:
            imap = (lambda n: (lambda b, j: (0,) * n))(nd)
        else:
            imap = (lambda n: (lambda b, j, k: (0,) * n))(nd)
        if single_buffer:
            # Constant-index params: a second pipeline buffer is pure VMEM waste.
            specs.append(pl.BlockSpec(shape, imap, pipeline_mode=pl.Buffered(1)))
        else:
            # Default double buffering; _choose_plan accounted 2x parameter bytes.
            specs.append(pl.BlockSpec(shape, imap))
    return specs


def _cost_estimate(lead, tail, in_f, hid_f, out_f, x_dtype, param_bytes):
    rows = lead * tail
    return pl.CostEstimate(
        flops=2 * rows * (in_f * hid_f + hid_f * out_f),
        transcendentals=rows,    # one rsqrt per normalized column
        bytes_accessed=int(rows * (in_f + out_f) * jnp.dtype(x_dtype).itemsize
                           + param_bytes),
    )


def _param_bytes(w1t, w2t, b1c, gc, betac, b2c):
    return (w1t.size * w1t.dtype.itemsize + w2t.size * w2t.dtype.itemsize
            + (b1c.size + gc.size + betac.size) * b1c.dtype.itemsize
            + b2c.size * b2c.dtype.itemsize)


def _mlp_pallas_resident(x3, w1t, b1c, gc, betac, w2t, b2c, tl, lb, single_buffer,
                         vmem_limit):
    lead, in_f, tail = x3.shape
    hid_f, out_f = w1t.shape[0], w2t.shape[0]
    grid = (lead // lb, pl.cdiv(tail, tl))

    consts = _const_specs(
        [(hid_f, in_f), (hid_f, 1), (hid_f, 1), (hid_f, 1), (out_f, hid_f),
         (out_f, 1)], ngrid=2, single_buffer=single_buffer)

    return pl.pallas_call(
        _make_resident_kernel(lb, hid_f),
        out_shape=jax.ShapeDtypeStruct((lead, out_f, tail), x3.dtype),
        grid_spec=pltpu.PrefetchScalarGridSpec(
            num_scalar_prefetch=0,
            grid=grid,
            in_specs=[pl.BlockSpec((lb, in_f, tl), lambda b, j: (b, 0, j))] + consts,
            out_specs=pl.BlockSpec((lb, out_f, tl), lambda b, j: (b, 0, j)),
        ),
        compiler_params=pltpu.CompilerParams(
            dimension_semantics=("parallel", "parallel"),
            vmem_limit_bytes=vmem_limit,
        ),
        cost_estimate=_cost_estimate(lead, tail, in_f, hid_f, out_f, x3.dtype,
                                     _param_bytes(w1t, w2t, b1c, gc, betac, b2c)),
    )(x3, w1t, b1c, gc, betac, w2t, b2c)


def _mlp_pallas_ktiled(x3, w1t, b1c, gc, betac, w2t, b2c, tl, tk, single_buffer,
                       vmem_limit):
    lead, in_f, tail = x3.shape
    hid_f, out_f = w1t.shape[0], w2t.shape[0]
    grid = (lead, pl.cdiv(tail, tl), in_f // tk)

    consts = _const_specs(
        [(hid_f, 1), (hid_f, 1), (hid_f, 1), (out_f, hid_f), (out_f, 1)],
        ngrid=3, single_buffer=single_buffer)

    return pl.pallas_call(
        _make_ktiled_kernel(hid_f),
        out_shape=jax.ShapeDtypeStruct((lead, out_f, tail), x3.dtype),
        grid_spec=pltpu.PrefetchScalarGridSpec(
            num_scalar_prefetch=0,
            grid=grid,
            in_specs=[pl.BlockSpec((1, tk, tl), lambda b, j, k: (b, k, j)),
                      pl.BlockSpec((hid_f, tk), lambda b, j, k: (0, k))] + consts,
            out_specs=pl.BlockSpec((1, out_f, tl), lambda b, j, k: (b, 0, j)),
            scratch_shapes=[pltpu.VMEM((hid_f, tl), jnp.float32)],
        ),
        compiler_params=pltpu.CompilerParams(
            dimension_semantics=("parallel", "parallel", "arbitrary"),
            vmem_limit_bytes=vmem_limit,
        ),
        cost_estimate=_cost_estimate(lead, tail, in_f, hid_f, out_f, x3.dtype,
                                     _param_bytes(w1t, w2t, b1c, gc, betac, b2c)),
    )(x3, w1t, b1c, gc, betac, w2t, b2c)


# -------------------------------------------------------------------- wrapper
def mlp_block_forward(x, params, dim=1):
    """x: torch-style tensor; `dim` is the feature axis swapped with -1 in torch."""
    w1, b1, gamma, beta, w2, b2 = params
    in_f, hid_f = w1.shape
    out_f = w2.shape[1]

    dim = dim % x.ndim
    assert x.shape[dim] == in_f
    lead = math.prod(x.shape[:dim])
    tail = math.prod(x.shape[dim + 1:])

    # Contiguity-preserving reshape -> (lead, in, tail); the torch transposes are
    # folded into the kernel (it consumes/produces channel-major tiles directly).
    x3 = x.reshape(lead, in_f, tail)

    # Channel-major parameter layout (one-time, tiny).
    w1t = w1.T                       # (hid, in)
    w2t = w2.T                       # (out, hid)
    b1c = b1.reshape(hid_f, 1)
    gc = gamma.reshape(hid_f, 1)
    betac = beta.reshape(hid_f, 1)
    b2c = b2.reshape(out_f, 1)
    # TODO(synk): on v7x an fp8 weight path (pre-cast W1/W2) would halve weight VMEM
    # residency and raise MXU throughput; not enabled here.

    single_buffer = _single_buffer_consts_supported()
    const_bufs = 1 if single_buffer else 2

    plan = _choose_plan(lead, in_f, hid_f, out_f, tail,
                        jnp.dtype(x.dtype).itemsize,
                        jnp.dtype(w1t.dtype).itemsize,
                        jnp.dtype(w2t.dtype).itemsize,
                        const_bufs)

    cap = _vmem_capacity_bytes()
    vmem_limit = min(int(cap * 3 // 4), 128 * _MIB)

    if plan["mode"] == "resident":
        out3 = _mlp_pallas_resident(x3, w1t, b1c, gc, betac, w2t, b2c,
                                    plan["tl"], plan["lb"], single_buffer, vmem_limit)
    else:
        out3 = _mlp_pallas_ktiled(x3, w1t, b1c, gc, betac, w2t, b2c,
                                  plan["tl"], plan["tk"], single_buffer, vmem_limit)

    return out3.reshape(x.shape[:dim] + (out_f,) + x.shape[dim + 1:])


# --------------------------------------------------------------- params / reference
def init_params(key, in_feature, hid_feature, out_feature, dtype=jnp.float32):
    k1, k2, k3, k4 = jax.random.split(key, 4)
    # Stored as (in, out) so the math matches torch's x @ W.T convention.
    w1 = jax.random.normal(k1, (in_feature, hid_feature), dtype) * 0.1
    b1 = jax.random.normal(k2, (1, hid_feature), dtype) * 0.1
    gamma = jnp.ones((1, hid_feature), dtype)   # nn.LayerNorm init
    beta = jnp.zeros((1, hid_feature), dtype)
    w2 = jax.random.normal(k3, (hid_feature, out_feature), dtype) * 0.1
    b2 = jax.random.normal(k4, (1, out_feature), dtype) * 0.1
    return (w1, b1, gamma, beta, w2, b2)


def reference_forward(x, params, dim=1):
    """Pure-JAX reference mirroring the PyTorch forward (matmuls at HIGHEST precision)."""
    w1, b1, gamma, beta, w2, b2 = params
    xt = jnp.swapaxes(x, dim, -1)
    h = jnp.matmul(xt, w1, precision=jax.lax.Precision.HIGHEST) + b1[0]
    h = jnp.maximum(h, 0.0)
    mean = jnp.mean(h, axis=-1, keepdims=True)
    var = jnp.mean(jnp.square(h - mean), axis=-1, keepdims=True)
    hn = (h - mean) / jnp.sqrt(var + LN_EPS)
    hn = hn * gamma[0] + beta[0]
    y = jnp.matmul(hn, w2, precision=jax.lax.Precision.HIGHEST) + b2[0]
    return jnp.swapaxes(y, dim, -1)


if __name__ == "__main__":
    # Small shapes consistent with MLPBlock(dim=1, in_feature=4, hid_feature=32,
    # out_feature=4): x is (batch=2, channels=4, seq=16).
    key = jax.random.PRNGKey(0)
    kx, kp = jax.random.split(key)

    B, C, L = 2, 4, 16
    in_feature, hid_feature, out_feature = C, 32, 4

    x = jax.random.normal(kx, (B, C, L), jnp.float32)
    params = init_params(kp, in_feature, hid_feature, out_feature)

    y = jax.block_until_ready(mlp_block_forward(x, params, dim=1))
    y_ref = reference_forward(x, params, dim=1)

    assert y.shape == (B, out_feature, L), y.shape
    err = float(jnp.max(jnp.abs(y - y_ref)))
    assert err < 5e-3, f"max abs err {err}"

    print("KERNEL_OK")
</pallas_src>

<mosaic_0001>
module attributes {stable_mosaic.version = 11 : i64} {
  func.func @kernel(%arg0: i32, %arg1: i32, %arg2: memref<1x4x16xf32, #tpu.memory_space<vmem>>, %arg3: memref<32x4xf32, #tpu.memory_space<vmem>>, %arg4: memref<32x1xf32, #tpu.memory_space<vmem>>, %arg5: memref<32x1xf32, #tpu.memory_space<vmem>>, %arg6: memref<32x1xf32, #tpu.memory_space<vmem>>, %arg7: memref<4x32xf32, #tpu.memory_space<vmem>>, %arg8: memref<4x1xf32, #tpu.memory_space<vmem>>, %arg9: memref<1x4x16xf32, #tpu.memory_space<vmem>>) attributes {dimension_semantics = [#tpu.dimension_semantics<parallel>, #tpu.dimension_semantics<parallel>], iteration_bounds = array<i64: 2, 1>, scalar_prefetch = 0 : i64, scratch_operands = 0 : i64, tpu.core_type = #tpu.core_type<tc>, window_params = [{transform_indices = @transform_0, window_bounds = array<i64: 1, 4, 16>}, {pipeline_mode = #tpu.pipeline_mode<synchronous>, transform_indices = @transform_1, window_bounds = array<i64: 32, 4>}, {pipeline_mode = #tpu.pipeline_mode<synchronous>, transform_indices = @transform_2, window_bounds = array<i64: 32, 1>}, {pipeline_mode = #tpu.pipeline_mode<synchronous>, transform_indices = @transform_3, window_bounds = array<i64: 32, 1>}, {pipeline_mode = #tpu.pipeline_mode<synchronous>, transform_indices = @transform_4, window_bounds = array<i64: 32, 1>}, {pipeline_mode = #tpu.pipeline_mode<synchronous>, transform_indices = @transform_5, window_bounds = array<i64: 4, 32>}, {pipeline_mode = #tpu.pipeline_mode<synchronous>, transform_indices = @transform_6, window_bounds = array<i64: 4, 1>}, {transform_indices = @transform_7, window_bounds = array<i64: 1, 4, 16>}]} {
    %c0 = arith.constant 0 : index
    %c0_0 = arith.constant 0 : index
    %0 = vector.load %arg3[%c0, %c0_0] : memref<32x4xf32, #tpu.memory_space<vmem>>, vector<32x4xf32>
    %c0_1 = arith.constant 0 : index
    %c0_2 = arith.constant 0 : index
    %1 = vector.load %arg7[%c0_1, %c0_2] : memref<4x32xf32, #tpu.memory_space<vmem>>, vector<4x32xf32>
    %c0_3 = arith.constant 0 : index
    %c0_4 = arith.constant 0 : index
    %2 = vector.load %arg4[%c0_3, %c0_4] : memref<32x1xf32, #tpu.memory_space<vmem>>, vector<32x1xf32>
    %c0_5 = arith.constant 0 : index
    %c0_6 = arith.constant 0 : index
    %3 = vector.load %arg5[%c0_5, %c0_6] : memref<32x1xf32, #tpu.memory_space<vmem>>, vector<32x1xf32>
    %c0_7 = arith.constant 0 : index
    %c0_8 = arith.constant 0 : index
    %4 = vector.load %arg6[%c0_7, %c0_8] : memref<32x1xf32, #tpu.memory_space<vmem>>, vector<32x1xf32>
    %c0_9 = arith.constant 0 : index
    %c0_10 = arith.constant 0 : index
    %5 = vector.load %arg8[%c0_9, %c0_10] : memref<4x1xf32, #tpu.memory_space<vmem>>, vector<4x1xf32>
    %c0_11 = arith.constant 0 : index
    %c0_12 = arith.constant 0 : index
    %c0_13 = arith.constant 0 : index
    %6 = vector.load %arg2[%c0_11, %c0_12, %c0_13] : memref<1x4x16xf32, #tpu.memory_space<vmem>>, vector<1x4x16xf32>
    %7 = vector.shape_cast %6 : vector<1x4x16xf32> to vector<4x16xf32>
    %cst = arith.constant dense<0.000000e+00> : vector<32x16xf32>
    %8 = tpu.matmul %0, %7, %cst {dimension_numbers = #tpu.dot_dimension_numbers<[1], [0], [0], [1], [0, 0, 1, 1], [], []>} : vector<32x4xf32>, vector<4x16xf32>, vector<32x16xf32> -> vector<32x16xf32>
    %9 = vector.broadcast %2 : vector<32x1xf32> to vector<32x16xf32>
    %10 = arith.addf %8, %9 : vector<32x16xf32>
    %cst_14 = arith.constant 0.000000e+00 : f32
    %11 = vector.broadcast %cst_14 : f32 to vector<32x16xf32>
    %12 = arith.maximumf %10, %11 : vector<32x16xf32>
    %cst_15 = arith.constant dense<0.000000e+00> : vector<16xf32>
    %13 = vector.multi_reduction <add>, %12, %cst_15 [0] : vector<32x16xf32> to vector<16xf32>
    %14 = vector.shape_cast %13 : vector<16xf32> to vector<1x16xf32>
    %15 = arith.mulf %12, %12 : vector<32x16xf32>
    %cst_16 = arith.constant dense<0.000000e+00> : vector<16xf32>
    %16 = vector.multi_reduction <add>, %15, %cst_16 [0] : vector<32x16xf32> to vector<16xf32>
    %17 = vector.shape_cast %16 : vector<16xf32> to vector<1x16xf32>
    %cst_17 = arith.constant 3.125000e-02 : f32
    %18 = vector.broadcast %cst_17 : f32 to vector<1x16xf32>
    %19 = arith.mulf %14, %18 : vector<1x16xf32>
    %cst_18 = arith.constant 3.125000e-02 : f32
    %20 = vector.broadcast %cst_18 : f32 to vector<1x16xf32>
    %21 = arith.mulf %17, %20 : vector<1x16xf32>
    %22 = arith.mulf %19, %19 : vector<1x16xf32>
    %23 = arith.subf %21, %22 : vector<1x16xf32>
    %cst_19 = arith.constant 0.000000e+00 : f32
    %24 = vector.broadcast %cst_19 : f32 to vector<1x16xf32>
    %25 = arith.maximumf %23, %24 : vector<1x16xf32>
    %cst_20 = arith.constant 9.99999974E-6 : f32
    %26 = vector.broadcast %cst_20 : f32 to vector<1x16xf32>
    %27 = arith.addf %25, %26 : vector<1x16xf32>
    %28 = math.rsqrt %27 : vector<1x16xf32>
    %29 = vector.broadcast %19 : vector<1x16xf32> to vector<32x16xf32>
    %30 = arith.subf %12, %29 : vector<32x16xf32>
    %31 = vector.broadcast %28 : vector<1x16xf32> to vector<32x16xf32>
    %32 = arith.mulf %30, %31 : vector<32x16xf32>
    %33 = vector.broadcast %3 : vector<32x1xf32> to vector<32x16xf32>
    %34 = arith.mulf %32, %33 : vector<32x16xf32>
    %35 = vector.broadcast %4 : vector<32x1xf32> to vector<32x16xf32>
    %36 = arith.addf %34, %35 : vector<32x16xf32>
    %cst_21 = arith.constant dense<0.000000e+00> : vector<4x16xf32>
    %37 = tpu.matmul %1, %36, %cst_21 {dimension_numbers = #tpu.dot_dimension_numbers<[1], [0], [0], [1], [0, 0, 1, 1], [], []>} : vector<4x32xf32>, vector<32x16xf32>, vector<4x16xf32> -> vector<4x16xf32>
    %38 = vector.broadcast %5 : vector<4x1xf32> to vector<4x16xf32>
    %39 = arith.addf %37, %38 : vector<4x16xf32>
    %c0_22 = arith.constant 0 : index
    %c0_23 = arith.constant 0 : index
    %c0_24 = arith.constant 0 : index
    %40 = vector.load %arg9[%c0_22, %c0_23, %c0_24] : memref<1x4x16xf32, #tpu.memory_space<vmem>>, vector<1x4x16xf32>
    %41 = vector.shape_cast %40 : vector<1x4x16xf32> to vector<4x16xf32>
    %42 = vector.shape_cast %39 : vector<4x16xf32> to vector<1x4x16xf32>
    tpu.vector_store %arg9[%c0_22, %c0_23, %c0_24], %42 {strides = array<i32>} : memref<1x4x16xf32, #tpu.memory_space<vmem>>, vector<1x4x16xf32>,
    return
  }
  func.func @transform_0(%arg0: i32, %arg1: i32) -> (i32, i32, i32) {
    %c0_i32 = arith.constant 0 : i32
    %c0_i32_0 = arith.constant 0 : i32
    return %arg0, %c0_i32, %arg1 : i32, i32, i32
  }
  func.func @transform_1(%arg0: i32, %arg1: i32) -> (i32, i32) {
    %c0_i32 = arith.constant 0 : i32
    %c0_i32_0 = arith.constant 0 : i32
    %c0_i32_1 = arith.constant 0 : i32
    return %c0_i32, %c0_i32_0 : i32, i32
  }
  func.func @transform_2(%arg0: i32, %arg1: i32) -> (i32, i32) {
    %c0_i32 = arith.constant 0 : i32
    %c0_i32_0 = arith.constant 0 : i32
    %c0_i32_1 = arith.constant 0 : i32
    return %c0_i32, %c0_i32_0 : i32, i32
  }
  func.func @transform_3(%arg0: i32, %arg1: i32) -> (i32, i32) {
    %c0_i32 = arith.constant 0 : i32
    %c0_i32_0 = arith.constant 0 : i32
    %c0_i32_1 = arith.constant 0 : i32
    return %c0_i32, %c0_i32_0 : i32, i32
  }
  func.func @transform_4(%arg0: i32, %arg1: i32) -> (i32, i32) {
    %c0_i32 = arith.constant 0 : i32
    %c0_i32_0 = arith.constant 0 : i32
    %c0_i32_1 = arith.constant 0 : i32
    return %c0_i32, %c0_i32_0 : i32, i32
  }
  func.func @transform_5(%arg0: i32, %arg1: i32) -> (i32, i32) {
    %c0_i32 = arith.constant 0 : i32
    %c0_i32_0 = arith.constant 0 : i32
    %c0_i32_1 = arith.constant 0 : i32
    return %c0_i32, %c0_i32_0 : i32, i32
  }
  func.func @transform_6(%arg0: i32, %arg1: i32) -> (i32, i32) {
    %c0_i32 = arith.constant 0 : i32
    %c0_i32_0 = arith.constant 0 : i32
    %c0_i32_1 = arith.constant 0 : i32
    return %c0_i32, %c0_i32_0 : i32, i32
  }
  func.func @transform_7(%arg0: i32, %arg1: i32) -> (i32, i32, i32) {
    %c0_i32 = arith.constant 0 : i32
    %c0_i32_0 = arith.constant 0 : i32
    return %arg0, %c0_i32, %arg1 : i32, i32, i32
  }
}

</mosaic_0001>

<llo_original>
// kernel: tpu_custom_call.1
$region0: #{tpu_custom_call.1}
  #allocation0 [shape = 'u32[]', space=smem, size = 0x4, offset = 0x4, fixed_abs, tag = 'smem constant byte address 0x4 - core index']
  #allocation1 [shape = 'u32[144,128]{1,0:T(1,128)}', space=vmem, size = 0x12000, scoped, tag = 'internal scratch']
  %s0 = inlined_call_operand.vmem [shape: f32[2,4,16], index: 0, kind: input, shape index: {}]
  %s1 = inlined_call_operand.vmem [shape: f32[32,4], index: 1, kind: input, shape index: {}]
  %s2 = inlined_call_operand.vmem [shape: f32[32,1], index: 2, kind: input, shape index: {}]
  %s3 = inlined_call_operand.vmem [shape: f32[32,1], index: 3, kind: input, shape index: {}]
  %s4 = inlined_call_operand.vmem [shape: f32[32,1], index: 4, kind: input, shape index: {}]
  %s5 = inlined_call_operand.vmem [shape: f32[4,32], index: 5, kind: input, shape index: {}]
  %s6 = inlined_call_operand.vmem [shape: f32[4,1], index: 6, kind: input, shape index: {}]
  %s7 = inlined_call_operand.hbm [shape: f32[2,4,16], index: 7, kind: output, shape index: {}]
  %s8 = sld [smem:[#allocation0]]
  $region61: #{tpu_custom_call.1} parent=0
    _
  %s10 = ssub.s32 1, %s8
  %s11 = scalar_select 0, %s10, %s8
  $region1: #{tpu_custom_call.1} parent=0
    #allocation2 [shape = 'u8[4096]{0}', space=vmem, size = 0x1000, scoped, tag = 'output window, operand 0']
    #allocation3 [shape = 's32[2]{0}', space=sflag, size = 0x8, scoped, tag = 'scoped memory for tpu_custom_call.1']
    %12 = vsyncpa [#allocation3], 0
    %s13 = scalar_lea.sflag [#allocation3], 1
    %14 = vsyncpa %s13, 0
    loop: start=0, step=1, limit=4
    $region2: #{tpu_custom_call.1} parent=1 // loop_pre_header
      _
    $region3: #{tpu_custom_call.1} parent=1 // loop_header
      %s16 = sphi 0, %s20
      %p17 = scmp.ge.s32.totalorder %s16, 4
      %s23 = sphi 0, %s35
      %s24 = sphi 0, %s31
      %s25 = sphi 0, %s23
      %s26 = sphi 0, %s24
      %s27 = sphi 0, %s25
      %s28 = sphi 0, %s26
      %s40 = sphi 0, %s42
      %s43 = sphi 0, %s40
      %s44 = sphi 0, %s43
      %s60 = sphi 0, %s44
      %s64 = sphi 0, %s64
      %s66 = sphi 0, %s64
      %s67 = sphi 0, %s66
      %s81 = sphi 0, %s67
      %s85 = sphi 0, %s85
      %s87 = sphi 0, %s85
      %s88 = sphi 0, %s87
      %s102 = sphi 0, %s88
      %s106 = sphi 0, %s106
      %s108 = sphi 0, %s106
      %s109 = sphi 0, %s108
      %s123 = sphi 0, %s109
      %s127 = sphi 0, %s127
      %s129 = sphi 0, %s127
      %s130 = sphi 0, %s129
      %s144 = sphi 0, %s130
      %s148 = sphi 0, %s148
      %s150 = sphi 0, %s148
      %s151 = sphi 0, %s150
      %s165 = sphi 0, %s151
      %s169 = sphi 0, %s169
      %s171 = sphi 0, %s169
      %s172 = sphi 0, %s171
      %s186 = sphi 0, %s172
      %s194 = sphi 0, %s196
      %s197 = sphi 0, %s194
      %s198 = sphi 0, %s197
      %s214 = sphi 0, %s198
    $region4: #{tpu_custom_call.1} parent=1 // loop_header_branch
      %19 = sbr.rel (%p17) target = $region8
    $region5: #{tpu_custom_call.1} parent=1 // loop_body
      %s21 = ssub.s32 %s16, 1
      %s22 = ssub.s32 %s16, 2
      %s29 = sadd.s32 1, %s24
      %p30 = scmp.ge.s32.totalorder %s29, 1
      %s31 = scalar_select %p30, 0, %s29
      %s32 = sadd.s32 1, %s23
      %s33 = scalar_select %p30, %s32, %s23
      %p34 = scmp.ge.s32.totalorder %s33, 2
      %s35 = scalar_select %p34, 0, %s33
      %s36 = ssub.s32 %s23, %s35
      %s37 = ssub.s32 %s24, %s31
      %s38 = sor.u32 %s36, %s37
      %p39 = scmp.eq.s32.totalorder %s38, 0
      %s41 = sadd.s32 %s40, 1
      %s42 = scalar_select %p39, %s40, %s41
      %p45 = pneg %p39
      %p46 = scmp.eq.s32.totalorder %s16, 1
      %p47 = por %p45, %p46
      %p48 = scmp.ne.s32.totalorder %s40, %s43
      %p49 = scmp.eq.s32.totalorder %s16, 0
      %p50 = por %p48, %p49
      %p51 = scmp.ne.s32.totalorder %s40, %s43
      %p52 = scmp.eq.s32.totalorder %s21, 1
      %p53 = por %p51, %p52
      %p54 = scmp.ne.s32.totalorder %s43, %s44
      %p55 = scmp.eq.s32.totalorder %s21, 0
      %p56 = por %p54, %p55
      %p57 = scmp.ne.s32.totalorder %s43, %s44
      %p58 = scmp.eq.s32.totalorder %s22, 1
      %p59 = por %p57, %p58
      %p61 = scmp.ne.s32.totalorder %s44, %s60
      %p62 = scmp.eq.s32.totalorder %s22, 0
      %p63 = por %p61, %p62
      %s65 = sadd.s32 %s64, 1
      %p68 = scmp.eq.s32.totalorder %s16, 1
      %p69 = scmp.ne.s32.totalorder %s64, %s66
      %p70 = scmp.eq.s32.totalorder %s16, 0
      %p71 = por %p69, %p70
      %p72 = scmp.ne.s32.totalorder %s64, %s66
      %p73 = scmp.eq.s32.totalorder %s21, 1
      %p74 = por %p72, %p73
      %p75 = scmp.ne.s32.totalorder %s66, %s67
      %p76 = scmp.eq.s32.totalorder %s21, 0
      %p77 = por %p75, %p76
      %p78 = scmp.ne.s32.totalorder %s66, %s67
      %p79 = scmp.eq.s32.totalorder %s22, 1
      %p80 = por %p78, %p79
      %p82 = scmp.ne.s32.totalorder %s67, %s81
      %p83 = scmp.eq.s32.totalorder %s22, 0
      %p84 = por %p82, %p83
      %s86 = sadd.s32 %s85, 1
      %p89 = scmp.eq.s32.totalorder %s16, 1
      %p90 = scmp.ne.s32.totalorder %s85, %s87
      %p91 = scmp.eq.s32.totalorder %s16, 0
      %p92 = por %p90, %p91
      %p93 = scmp.ne.s32.totalorder %s85, %s87
      %p94 = scmp.eq.s32.totalorder %s21, 1
      %p95 = por %p93, %p94
      %p96 = scmp.ne.s32.totalorder %s87, %s88
      %p97 = scmp.eq.s32.totalorder %s21, 0
      %p98 = por %p96, %p97
      %p99 = scmp.ne.s32.totalorder %s87, %s88
      %p100 = scmp.eq.s32.totalorder %s22, 1
      %p101 = por %p99, %p100
      %p103 = scmp.ne.s32.totalorder %s88, %s102
      %p104 = scmp.eq.s32.totalorder %s22, 0
      %p105 = por %p103, %p104
      %s107 = sadd.s32 %s106, 1
      %p110 = scmp.eq.s32.totalorder %s16, 1
      %p111 = scmp.ne.s32.totalorder %s106, %s108
      %p112 = scmp.eq.s32.totalorder %s16, 0
      %p113 = por %p111, %p112
      %p114 = scmp.ne.s32.totalorder %s106, %s108
      %p115 = scmp.eq.s32.totalorder %s21, 1
      %p116 = por %p114, %p115
      %p117 = scmp.ne.s32.totalorder %s108, %s109
      %p118 = scmp.eq.s32.totalorder %s21, 0
      %p119 = por %p117, %p118
      %p120 = scmp.ne.s32.totalorder %s108, %s109
      %p121 = scmp.eq.s32.totalorder %s22, 1
      %p122 = por %p120, %p121
      %p124 = scmp.ne.s32.totalorder %s109, %s123
      %p125 = scmp.eq.s32.totalorder %s22, 0
      %p126 = por %p124, %p125
      %s128 = sadd.s32 %s127, 1
      %p131 = scmp.eq.s32.totalorder %s16, 1
      %p132 = scmp.ne.s32.totalorder %s127, %s129
      %p133 = scmp.eq.s32.totalorder %s16, 0
      %p134 = por %p132, %p133
      %p135 = scmp.ne.s32.totalorder %s127, %s129
      %p136 = scmp.eq.s32.totalorder %s21, 1
      %p137 = por %p135, %p136
      %p138 = scmp.ne.s32.totalorder %s129, %s130
      %p139 = scmp.eq.s32.totalorder %s21, 0
      %p140 = por %p138, %p139
      %p141 = scmp.ne.s32.totalorder %s129, %s130
      %p142 = scmp.eq.s32.totalorder %s22, 1
      %p143 = por %p141, %p142
      %p145 = scmp.ne.s32.totalorder %s130, %s144
      %p146 = scmp.eq.s32.totalorder %s22, 0
      %p147 = por %p145, %p146
      %s149 = sadd.s32 %s148, 1
      %p152 = scmp.eq.s32.totalorder %s16, 1
      %p153 = scmp.ne.s32.totalorder %s148, %s150
      %p154 = scmp.eq.s32.totalorder %s16, 0
      %p155 = por %p153, %p154
      %p156 = scmp.ne.s32.totalorder %s148, %s150
      %p157 = scmp.eq.s32.totalorder %s21, 1
      %p158 = por %p156, %p157
      %p159 = scmp.ne.s32.totalorder %s150, %s151
      %p160 = scmp.eq.s32.totalorder %s21, 0
      %p161 = por %p159, %p160
      %p162 = scmp.ne.s32.totalorder %s150, %s151
      %p163 = scmp.eq.s32.totalorder %s22, 1
      %p164 = por %p162, %p163
      %p166 = scmp.ne.s32.totalorder %s151, %s165
      %p167 = scmp.eq.s32.totalorder %s22, 0
      %p168 = por %p166, %p167
      %s170 = sadd.s32 %s169, 1
      %p173 = scmp.eq.s32.totalorder %s16, 1
      %p174 = scmp.ne.s32.totalorder %s169, %s171
      %p175 = scmp.eq.s32.totalorder %s16, 0
      %p176 = por %p174, %p175
      %p177 = scmp.ne.s32.totalorder %s169, %s171
      %p178 = scmp.eq.s32.totalorder %s21, 1
      %p179 = por %p177, %p178
      %p180 = scmp.ne.s32.totalorder %s171, %s172
      %p181 = scmp.eq.s32.totalorder %s21, 0
      %p182 = por %p180, %p181
      %p183 = scmp.ne.s32.totalorder %s171, %s172
      %p184 = scmp.eq.s32.totalorder %s22, 1
      %p185 = por %p183, %p184
      %p187 = scmp.ne.s32.totalorder %s172, %s186
      %p188 = scmp.eq.s32.totalorder %s22, 0
      %p189 = por %p187, %p188
      %s190 = ssub.s32 %s23, %s35
      %s191 = ssub.s32 %s24, %s31
      %s192 = sor.u32 %s190, %s191
      %p193 = scmp.eq.s32.totalorder %s192, 0
      %s195 = sadd.s32 %s194, 1
      %s196 = scalar_select %p193, %s194, %s195
      %p199 = pneg %p193
      %p200 = scmp.eq.s32.totalorder %s16, 1
      %p201 = por %p199, %p200
      %p202 = scmp.ne.s32.totalorder %s194, %s197
      %p203 = scmp.eq.s32.totalorder %s16, 0
      %p204 = por %p202, %p203
      %p205 = scmp.ne.s32.totalorder %s194, %s197
      %p206 = scmp.eq.s32.totalorder %s21, 1
      %p207 = por %p205, %p206
      %p208 = scmp.ne.s32.totalorder %s197, %s198
      %p209 = scmp.eq.s32.totalorder %s21, 0
      %p210 = por %p208, %p209
      %p211 = scmp.ne.s32.totalorder %s197, %s198
      %p212 = scmp.eq.s32.totalorder %s22, 1
      %p213 = por %p211, %p212
      %p215 = scmp.ne.s32.totalorder %s198, %s214
      %p216 = scmp.eq.s32.totalorder %s22, 0
      %p217 = por %p215, %p216
      %p218 = scmp.le.s32.totalorder 1, %s16
      %p219 = scmp.lt.s32.totalorder %s16, 3
      %p220 = pnand %p218, %p219
      %p221 = pneg %p220
      // Predicated region
      $region9: #{tpu_custom_call.1} parent=5 // pred_check
        _
      $region10: #{tpu_custom_call.1} parent=5 // pred_check_branch
        %223 = sbr.rel (%p220) target = $region12
      $region11: #{tpu_custom_call.1} parent=5 // pred_region
        %s224 = ssub.s32 %s16, 1
        // Predicated region
        $region13: #{tpu_custom_call.1} parent=11 // pred_check
          %p225 = pneg %p77
        $region14: #{tpu_custom_call.1} parent=11 // pred_check_branch
          %227 = sbr.rel (%p225) target = $region16
        $region15: #{tpu_custom_call.1} parent=11 // pred_region
          _
        $region16: #{tpu_custom_call.1} parent=11 // pred_fallthru
          _
        // Predicated region
        $region17: #{tpu_custom_call.1} parent=11 // pred_check
          %p228 = pneg %p98
        $region18: #{tpu_custom_call.1} parent=11 // pred_check_branch
          %230 = sbr.rel (%p228) target = $region20
        $region19: #{tpu_custom_call.1} parent=11 // pred_region
          _
        $region20: #{tpu_custom_call.1} parent=11 // pred_fallthru
          _
        // Predicated region
        $region21: #{tpu_custom_call.1} parent=11 // pred_check
          %p231 = pneg %p119
        $region22: #{tpu_custom_call.1} parent=11 // pred_check_branch
          %233 = sbr.rel (%p231) target = $region24
        $region23: #{tpu_custom_call.1} parent=11 // pred_region
          _
        $region24: #{tpu_custom_call.1} parent=11 // pred_fallthru
          _
        // Predicated region
        $region25: #{tpu_custom_call.1} parent=11 // pred_check
          %p234 = pneg %p140
        $region26: #{tpu_custom_call.1} parent=11 // pred_check_branch
          %236 = sbr.rel (%p234) target = $region28
        $region27: #{tpu_custom_call.1} parent=11 // pred_region
          _
        $region28: #{tpu_custom_call.1} parent=11 // pred_fallthru
          _
        // Predicated region
        $region29: #{tpu_custom_call.1} parent=11 // pred_check
          %p237 = pneg %p161
        $region30: #{tpu_custom_call.1} parent=11 // pred_check_branch
          %239 = sbr.rel (%p237) target = $region32
        $region31: #{tpu_custom_call.1} parent=11 // pred_region
          _
        $region32: #{tpu_custom_call.1} parent=11 // pred_fallthru
          _
        // Predicated region
        $region33: #{tpu_custom_call.1} parent=11 // pred_check
          %p240 = pneg %p182
        $region34: #{tpu_custom_call.1} parent=11 // pred_check_branch
          %242 = sbr.rel (%p240) target = $region36
        $region35: #{tpu_custom_call.1} parent=11 // pred_region
          _
        $region36: #{tpu_custom_call.1} parent=11 // pred_fallthru
          _
      $region12: #{tpu_custom_call.1} parent=5 // pred_fallthru
        _
      %p243 = scmp.lt.s32.totalorder %s16, 2
      // Predicated region
      $region37: #{tpu_custom_call.1} parent=5 // pred_check
        %p244 = pneg %p243
      $region38: #{tpu_custom_call.1} parent=5 // pred_check_branch
        %246 = sbr.rel (%p244) target = $region40
      $region39: #{tpu_custom_call.1} parent=5 // pred_region
        // Predicated region
        $region41: #{tpu_custom_call.1} parent=39 // pred_check
          %p247 = pneg %p50
        $region42: #{tpu_custom_call.1} parent=39 // pred_check_branch
          %249 = sbr.rel (%p247) target = $region44
        $region43: #{tpu_custom_call.1} parent=39 // pred_region
          %p250 = scmp.lt.s32.totalorder %s23, 1
          %s251 = scalar_select %p250, %s23, 1
          %p252 = scmp.lt.s32.totalorder %s24, 0
          %s253 = scalar_select %p252, %s24, 0
          %s254 = sadd.s32 %s253, %s251
          %s255 = smul.addr %s254, 4
          %s256 = scalar_lea.vmem %s0, %s255
        $region44: #{tpu_custom_call.1} parent=39 // pred_fallthru
          _
      $region40: #{tpu_custom_call.1} parent=5 // pred_fallthru
        _
      %p257 = scmp.le.s32.totalorder 1, %s16
      %p258 = scmp.lt.s32.totalorder %s16, 3
      %p259 = pnand %p257, %p258
      %p260 = pneg %p259
      // Predicated region
      $region45: #{tpu_custom_call.1} parent=5 // pred_check
        _
      $region46: #{tpu_custom_call.1} parent=5 // pred_check_branch
        %262 = sbr.rel (%p259) target = $region48
      $region47: #{tpu_custom_call.1} parent=5 // pred_region
        %s263 = ssub.s32 %s16, 1
        %p264 = scmp.lt.s32.totalorder %s25, 1
        %s265 = scalar_select %p264, %s25, 1
        %p266 = scmp.lt.s32.totalorder %s26, 0
        %s267 = scalar_select %p266, %s26, 0
        %s268 = sadd.s32 %s267, %s265
        %s269 = smul.addr %s268, 4
        %s270 = scalar_lea.vmem %s0, %s269
        %p271 = pneg %p56
        %p272 = pneg %p53
        %p273 = pneg %p77
        %p274 = pneg %p74
        %p275 = pneg %p98
        %p276 = pneg %p95
        %p277 = pneg %p119
        %p278 = pneg %p116
        %p279 = pneg %p140
        %p280 = pneg %p137
        %p281 = pneg %p161
        %p282 = pneg %p158
        %p283 = pneg %p182
        %p284 = pneg %p179
        %p285 = pneg %p210
        %p286 = pneg %p207
        %s287 = sand.u32 %s197, 1
        %s288 = scalar_lea.sflag [#allocation3], %s287
        %s289 = sand.u32 %s197, 1
        %s290 = smul.addr %s289, 4
        %s291 = scalar_lea.vmem [#allocation2], %s290
        %p292 = scmp.lt.s32.totalorder %s25, 1
        %s293 = scalar_select %p292, %s25, 1
        %p294 = scmp.lt.s32.totalorder %s26, 0
        %s295 = scalar_select %p294, %s26, 0
        %s296 = sadd.s32 %s295, %s293
        %s297 = smul.addr %s296, 4
        %s298 = scalar_lea.vmem %s0, %s297
        %v299 = vld [vmem:[%s1] sm:$0xff]
        %v300 = vld [vmem:[%s1 + $0x8] sm:$0xff]
        %v301 = vld [vmem:[%s1 + $0x10] sm:$0xff]
        %v302 = vld [vmem:[%s1 + $0x18] sm:$0xff]
        %v303 = vld [vmem:[%s5] sm:$0xf]
        %v304 = vld [vmem:[%s2] sm:$0xff]
        %v305 = vld [vmem:[%s2 + $0x8] sm:$0xff]
        %v306 = vld [vmem:[%s2 + $0x10] sm:$0xff]
        %v307 = vld [vmem:[%s2 + $0x18] sm:$0xff]
        %v308 = vld [vmem:[%s3] sm:$0xff]
        %v309 = vld [vmem:[%s3 + $0x8] sm:$0xff]
        %v310 = vld [vmem:[%s3 + $0x10] sm:$0xff]
        %v311 = vld [vmem:[%s3 + $0x18] sm:$0xff]
        %v312 = vld [vmem:[%s4] sm:$0xff]
        %v313 = vld [vmem:[%s4 + $0x8] sm:$0xff]
        %v314 = vld [vmem:[%s4 + $0x10] sm:$0xff]
        %v315 = vld [vmem:[%s4 + $0x18] sm:$0xff]
        %v316 = vld [vmem:[%s6] sm:$0xf]
        %v317 = vld [vmem:[%s298] sm:$0xf]
        %319 = vset.pattern.permute.xlu0 0
        %320 = vperm.xlu0 %319, %v304
        %v321 = vpop.permute.xlu0 %320
        %324 = vset.pattern.permute.xlu0 0
        %325 = vperm.xlu0 %324, %v305
        %v326 = vpop.permute.xlu0 %325
        %329 = vset.pattern.permute.xlu0 0
        %330 = vperm.xlu0 %329, %v306
        %v331 = vpop.permute.xlu0 %330
        %334 = vset.pattern.permute.xlu0 0
        %335 = vperm.xlu0 %334, %v307
        %v336 = vpop.permute.xlu0 %335
        %vm338 = vcmask 31744
        %v340 = vsel %vm338, %v299, 0
        %v343 = vsel %vm338, %v300, 0
        %v346 = vsel %vm338, %v301, 0
        %v349 = vsel %vm338, %v302, 0
        %vm351 = vcmask 1043456
        %v353 = vsel %vm351, %v317, 0
        %355 = vmatprep.subr.mxu0 0.0
        %356 = vmatpush1.msra.mxu0 %v353
        %357 = vmatprep.subr.mxu0 0.0
        %358 = vmatpush1.msra.mxu0 0.0
        %359 = vmatprep.subr.mxu0 0.0
        %360 = vmatpush1.msra.mxu0 0.0
        %361 = vmatprep.subr.mxu0 0.0
        %362 = vmatpush1.msra.mxu0 0.0
        %363 = vmatprep.subr.mxu0 0.0
        %364 = vmatpush1.msra.mxu0 0.0
        %365 = vmatprep.subr.mxu0 0.0
        %366 = vmatpush1.msra.mxu0 0.0
        %367 = vmatprep.subr.mxu0 0.0
        %368 = vmatpush1.msra.mxu0 0.0
        %369 = vmatprep.subr.mxu0 0.0
        %370 = vmatpush1.msra.mxu0 0.0
        %371 = vmatprep.subr.mxu0 0.0
        %372 = vmatpush1.msra.mxu0 0.0
        %373 = vmatprep.subr.mxu0 0.0
        %374 = vmatpush1.msra.mxu0 0.0
        %375 = vmatprep.subr.mxu0 0.0
        %376 = vmatpush1.msra.mxu0 0.0
        %377 = vmatprep.subr.mxu0 0.0
        %378 = vmatpush1.msra.mxu0 0.0
        %379 = vmatprep.subr.mxu0 0.0
        %380 = vmatpush1.msra.mxu0 0.0
        %381 = vmatprep.subr.mxu0 0.0
        %382 = vmatpush1.msra.mxu0 0.0
        %383 = vmatprep.subr.mxu0 0.0
        %384 = vmatpush1.msra.mxu0 0.0
        %385 = vmatprep.subr.mxu0 0.0
        %386 = vmatpush1.msra.mxu0 0.0
        %387 = vmatprep.subr.mxu0 0.0
        %388 = vmatpush1.msra.mxu0 0.0
        %389 = vmatprep.subr.mxu0 0.0
        %390 = vmatpush1.msra.mxu0 0.0
        %391 = vmatprep.subr.mxu0 0.0
        %392 = vmatpush1.msra.mxu0 0.0
        %393 = vmatprep.subr.mxu0 0.0
        %394 = vmatpush1.msra.mxu0 0.0
        %395 = vmatprep.subr.mxu0 0.0
        %396 = vmatpush1.msra.mxu0 0.0
        %397 = vmatprep.subr.mxu0 0.0
        %398 = vmatpush1.msra.mxu0 0.0
        %399 = vmatprep.subr.mxu0 0.0
        %400 = vmatpush1.msra.mxu0 0.0
        %401 = vmatprep.subr.mxu0 0.0
        %402 = vmatpush1.msra.mxu0 0.0
        %403 = vmatprep.subr.mxu0 0.0
        %404 = vmatpush1.msra.mxu0 0.0
        %405 = vmatprep.subr.mxu0 0.0
        %406 = vmatpush1.msra.mxu0 0.0
        %407 = vmatprep.subr.mxu0 0.0
        %408 = vmatpush1.msra.mxu0 0.0
        %409 = vmatprep.subr.mxu0 0.0
        %410 = vmatpush1.msra.mxu0 0.0
        %411 = vmatprep.subr.mxu0 0.0
        %412 = vmatpush1.msra.mxu0 0.0
        %413 = vmatprep.subr.mxu0 0.0
        %414 = vmatpush1.msra.mxu0 0.0
        %415 = vmatprep.subr.mxu0 0.0
        %416 = vmatpush1.msra.mxu0 0.0
        %417 = vmatprep.subr.mxu0 0.0
        %418 = vmatpush1.msra.mxu0 0.0
        %419 = vmatprep.mubr.f32.mxu0 0.0
        %420 = vmatmul.mubr.f32.gmra.mrb[0].mxu0 %v340
        %v421 = vpop.f32.mrb[0].mxu0
        %v422 = vadd.f32 %v321, %v421
        %v423 = vpop.f32.mrb[0].mxu0
        %424 = vmatprep.mubr.f32.mxu0 0.0
        %425 = vmatmul.mubr.f32.gmra.mrb[0].mxu0 %v343
        %v426 = vpop.f32.mrb[0].mxu0
        %v427 = vadd.f32 %v326, %v426
        %v428 = vpop.f32.mrb[0].mxu0
        %429 = vmatprep.mubr.f32.mxu0 0.0
        %430 = vmatmul.mubr.f32.gmra.mrb[0].mxu0 %v346
        %v431 = vpop.f32.mrb[0].mxu0
        %v432 = vadd.f32 %v331, %v431
        %v433 = vpop.f32.mrb[0].mxu0
        %434 = vmatprep.mubr.f32.mxu0 0.0
        %435 = vmatmul.mubr.f32.gmra.mrb[0].mxu0 %v349
        %v436 = vpop.f32.mrb[0].mxu0
        %v437 = vadd.f32 %v336, %v436
        %v438 = vpop.f32.mrb[0].mxu0
        %439 = vdwg.mxu0
        %v440 = vmax.f32 %v422, 0.0
        %v441 = vmax.f32 %v427, 0.0
        %v442 = vmax.f32 %v432, 0.0
        %v443 = vmax.f32 %v437, 0.0
        %vm444 = vcmask 130048
        %v445 = vsel %vm444, %v440, 0.0
        %v446 = vsel %vm444, %v441, 0.0
        %v447 = vadd.f32 %v445, %v446
        %v448 = vsel %vm444, %v442, 0.0
        %v449 = vadd.f32 %v447, %v448
        %v450 = vsel %vm444, %v443, 0.0
        %v451 = vadd.f32 %v449, %v450
        %v452 = vrot.slane %v451, 4
        %v453 = vadd.f32 %v451, %v452
        %v454 = vrot.slane %v453, 2
        %v455 = vadd.f32 %v453, %v454
        %v456 = vrot.slane %v455, 1
        %v457 = vadd.f32 %v455, %v456
        %v458 = vmul.f32 %v440, %v440
        %v459 = vmul.f32 %v441, %v441
        %v460 = vmul.f32 %v442, %v442
        %v461 = vmul.f32 %v443, %v443
        %v462 = vsel %vm444, %v458, 0.0
        %v463 = vsel %vm444, %v459, 0.0
        %v464 = vadd.f32 %v462, %v463
        %v465 = vsel %vm444, %v460, 0.0
        %v466 = vadd.f32 %v464, %v465
        %v467 = vsel %vm444, %v461, 0.0
        %v468 = vadd.f32 %v466, %v467
        %v469 = vrot.slane %v468, 4
        %v470 = vadd.f32 %v468, %v469
        %v471 = vrot.slane %v470, 2
        %v472 = vadd.f32 %v470, %v471
        %v473 = vrot.slane %v472, 1
        %v474 = vadd.f32 %v472, %v473
        %v475 = vmul.f32 %v457, 0.03125
        %v476 = vmul.f32 %v474, 0.03125
        %v477 = vmul.f32 %v475, %v475
        %v478 = vsub.f32 %v476, %v477
        %v479 = vmax.f32 %v478, 0.0
        %v480 = vadd.f32 %v479, 1e-05
        %v481 = vrsqrt.pop %v480
        %v482 = vsub.f32 %v440, %v475
        %v483 = vsub.f32 %v441, %v475
        %v484 = vsub.f32 %v442, %v475
        %v485 = vsub.f32 %v443, %v475
        %v486 = vmul.f32 %v482, %v481
        %v487 = vmul.f32 %v483, %v481
        %v488 = vmul.f32 %v484, %v481
        %v489 = vmul.f32 %v485, %v481
        %491 = vset.pattern.permute.xlu0 0
        %492 = vperm.xlu0 %491, %v308
        %v493 = vpop.permute.xlu0 %492
        %496 = vset.pattern.permute.xlu0 0
        %497 = vperm.xlu0 %496, %v309
        %v498 = vpop.permute.xlu0 %497
        %501 = vset.pattern.permute.xlu0 0
        %502 = vperm.xlu0 %501, %v310
        %v503 = vpop.permute.xlu0 %502
        %506 = vset.pattern.permute.xlu0 0
        %507 = vperm.xlu0 %506, %v311
        %v508 = vpop.permute.xlu0 %507
        %v510 = vmul.f32 %v486, %v493
        %v511 = vmul.f32 %v487, %v498
        %v512 = vmul.f32 %v488, %v503
        %v513 = vmul.f32 %v489, %v508
        %515 = vset.pattern.permute.xlu0 0
        %516 = vperm.xlu0 %515, %v312
        %v517 = vpop.permute.xlu0 %516
        %520 = vset.pattern.permute.xlu0 0
        %521 = vperm.xlu0 %520, %v313
        %v522 = vpop.permute.xlu0 %521
        %525 = vset.pattern.permute.xlu0 0
        %526 = vperm.xlu0 %525, %v314
        %v527 = vpop.permute.xlu0 %526
        %530 = vset.pattern.permute.xlu0 0
        %531 = vperm.xlu0 %530, %v315
        %v532 = vpop.permute.xlu0 %531
        %v534 = vadd.f32 %v510, %v517
        %v535 = vadd.f32 %v511, %v522
        %v536 = vadd.f32 %v512, %v527
        %v537 = vadd.f32 %v513, %v532
        %539 = vset.pattern.permute.xlu0 0
        %540 = vperm.xlu0 %539, %v316
        %v541 = vpop.permute.xlu0 %540
        %vm543 = vcmask 261120
        %v545 = vsel %vm543, %v303, 0
        %547 = vmatprep.subr.mxu0 0.0
        %548 = vmatpush1.msra.mxu0 %v534
        %549 = vmatprep.subr.mxu0 0.0
        %550 = vmatpush1.msra.mxu0 %v535
        %551 = vmatprep.subr.mxu0 0.0
        %552 = vmatpush1.msra.mxu0 %v536
        %553 = vmatprep.subr.mxu0 0.0
        %554 = vmatpush1.msra.mxu0 %v537
        %555 = vmatprep.subr.mxu0 0.0
        %556 = vmatpush1.msra.mxu0 0.0
        %557 = vmatprep.subr.mxu0 0.0
        %558 = vmatpush1.msra.mxu0 0.0
        %559 = vmatprep.subr.mxu0 0.0
        %560 = vmatpush1.msra.mxu0 0.0
        %561 = vmatprep.subr.mxu0 0.0
        %562 = vmatpush1.msra.mxu0 0.0
        %563 = vmatprep.subr.mxu0 0.0
        %564 = vmatpush1.msra.mxu0 0.0
        %565 = vmatprep.subr.mxu0 0.0
        %566 = vmatpush1.msra.mxu0 0.0
        %567 = vmatprep.subr.mxu0 0.0
        %568 = vmatpush1.msra.mxu0 0.0
        %569 = vmatprep.subr.mxu0 0.0
        %570 = vmatpush1.msra.mxu0 0.0
        %571 = vmatprep.subr.mxu0 0.0
        %572 = vmatpush1.msra.mxu0 0.0
        %573 = vmatprep.subr.mxu0 0.0
        %574 = vmatpush1.msra.mxu0 0.0
        %575 = vmatprep.subr.mxu0 0.0
        %576 = vmatpush1.msra.mxu0 0.0
        %577 = vmatprep.subr.mxu0 0.0
        %578 = vmatpush1.msra.mxu0 0.0
        %579 = vmatprep.subr.mxu0 0.0
        %580 = vmatpush1.msra.mxu0 0.0
        %581 = vmatprep.subr.mxu0 0.0
        %582 = vmatpush1.msra.mxu0 0.0
        %583 = vmatprep.subr.mxu0 0.0
        %584 = vmatpush1.msra.mxu0 0.0
        %585 = vmatprep.subr.mxu0 0.0
        %586 = vmatpush1.msra.mxu0 0.0
        %587 = vmatprep.subr.mxu0 0.0
        %588 = vmatpush1.msra.mxu0 0.0
        %589 = vmatprep.subr.mxu0 0.0
        %590 = vmatpush1.msra.mxu0 0.0
        %591 = vmatprep.subr.mxu0 0.0
        %592 = vmatpush1.msra.mxu0 0.0
        %593 = vmatprep.subr.mxu0 0.0
        %594 = vmatpush1.msra.mxu0 0.0
        %595 = vmatprep.subr.mxu0 0.0
        %596 = vmatpush1.msra.mxu0 0.0
        %597 = vmatprep.subr.mxu0 0.0
        %598 = vmatpush1.msra.mxu0 0.0
        %599 = vmatprep.subr.mxu0 0.0
        %600 = vmatpush1.msra.mxu0 0.0
        %601 = vmatprep.subr.mxu0 0.0
        %602 = vmatpush1.msra.mxu0 0.0
        %603 = vmatprep.subr.mxu0 0.0
        %604 = vmatpush1.msra.mxu0 0.0
        %605 = vmatprep.subr.mxu0 0.0
        %606 = vmatpush1.msra.mxu0 0.0
        %607 = vmatprep.subr.mxu0 0.0
        %608 = vmatpush1.msra.mxu0 0.0
        %609 = vmatprep.subr.mxu0 0.0
        %610 = vmatpush1.msra.mxu0 0.0
        %611 = vmatprep.mubr.f32.mxu0 0.0
        %612 = vmatmul.mubr.f32.gmra.mrb[0].mxu0 %v545
        %v613 = vpop.f32.mrb[0].mxu0
        %v614 = vadd.f32 %v541, %v613
        %v615 = vpop.f32.mrb[0].mxu0
        %616 = vdwg.mxu0
        %vm617 = vcmask 125952
        %618 = vst.msk [vmem:[%s291] sm:$0xf] %vm617, %v614
        %s619 = sand.u32 %s197, 1
        %s620 = scalar_lea.sflag [#allocation3], %s619
        %s621 = sand.u32 %s197, 1
        %s622 = smul.addr %s621, 4
        %s623 = scalar_lea.vmem [#allocation2], %s622
        // Predicated region
        $region49: #{tpu_custom_call.1} parent=47 // pred_check
          %p624 = pneg %p207
        $region50: #{tpu_custom_call.1} parent=47 // pred_check_branch
          %626 = sbr.rel (%p624) target = $region52
        $region51: #{tpu_custom_call.1} parent=47 // pred_region
          %s628 = ssub.s32 64, 64
          %629 = vsyncadd %s620, %s628
          %s630 = sadd.s32 %s26, %s25
          %s631 = smul.addr %s630, 64
          %s632 = scalar_lea.hbm %s7, %s631
          %s634 = sshll.u32 %s623, 4
          %s635 = int_to_ptr.vmem [resolvable:$true] %s634
          %637 = dma.vmem_to_hbm [thread:$0]  %s635, 64, %s632, %s620
        $region52: #{tpu_custom_call.1} parent=47 // pred_fallthru
          _
      $region48: #{tpu_custom_call.1} parent=5 // pred_fallthru
        _
      %p638 = scmp.le.s32.totalorder 2, %s16
      // Predicated region
      $region53: #{tpu_custom_call.1} parent=5 // pred_check
        %p639 = pneg %p638
      $region54: #{tpu_custom_call.1} parent=5 // pred_check_branch
        %641 = sbr.rel (%p639) target = $region56
      $region55: #{tpu_custom_call.1} parent=5 // pred_region
        %s642 = ssub.s32 %s16, 2
        // Predicated region
        $region57: #{tpu_custom_call.1} parent=55 // pred_check
          %p643 = pneg %p213
        $region58: #{tpu_custom_call.1} parent=55 // pred_check_branch
          %645 = sbr.rel (%p643) target = $region60
        $region59: #{tpu_custom_call.1} parent=55 // pred_region
          %s646 = sand.u32 %s198, 1
          %s647 = scalar_lea.sflag [#allocation3], %s646
          %s648 = sand.u32 %s198, 1
          %s649 = smul.addr %s648, 4
          %s650 = scalar_lea.vmem [#allocation2], %s649
          %651 = dma.done %s647, 64
        $region60: #{tpu_custom_call.1} parent=55 // pred_fallthru
          _
      $region56: #{tpu_custom_call.1} parent=5 // pred_fallthru
        _
    $region6: #{tpu_custom_call.1} parent=1 // loop_footer
      %s20 = sadd.s32 1, %s16
    $region7: #{tpu_custom_call.1} parent=1 // loop_footer_branch
      %15 = sbr.rel target = $region3
    $region8: #{tpu_custom_call.1} parent=1 // loop_exit
      _
    %652 = vsyncpa [#allocation3], 1
    %s653 = scalar_lea.sflag [#allocation3], 1
    %654 = vsyncpa %s653, 1

</llo_original>
